<compile_context>
chip_gen: v7x
topology: tpu7x:2x2x1
jax: 0.10.0
libtpu: 0.0.40
codegen_flags: <defaults>
</compile_context>

<pallas_src>
import jax
import jax.numpy as jnp
from jax.experimental import pallas as pl
from jax.experimental.pallas import tpu as pltpu


def _brelu_kernel(x_ref, o_ref):
    x = x_ref[...]
    # relu6(6*x)/6 == min(max(x, 0), 1): pure VPU clamp, dtype-preserving.
    zero = jnp.zeros((), dtype=x.dtype)
    one = jnp.ones((), dtype=x.dtype)
    o_ref[...] = jnp.minimum(jnp.maximum(x, zero), one)


# Minimum sublane count per vreg tile, keyed by dtype itemsize (bytes).
_SUBLANE_MIN = {4: 8, 2: 16, 1: 32}
# Candidate lane widths (last dim of the 2D slab), widest first.
_LANE_CANDIDATES = (4096, 2048, 1024, 512, 256, 128)


def brelu(x: jax.Array,
          *,
          block_bytes: int = 2 * 1024 * 1024,
          min_kernel_bytes: int = 1 << 18) -> jax.Array:
    """Elementwise BReLU: clamp(x, 0, 1), as a Pallas TPU kernel.

    block_bytes: target bytes per (input) block.  Keep <= ~2-3 MiB so that the
      double-buffered in+out buffers (4x block) fit the default scoped-VMEM
      limit on all TPU generations (v5e 16 MiB, v6e/v7x 32 MiB).
    min_kernel_bytes: below this size (or if the flat length is not a multiple
      of 128 lanes) fall back to XLA's fused clip -- it is already roofline for
      tiny / ragged tensors and avoids any padding copy.
    """
    orig_shape = x.shape
    orig_dtype = x.dtype
    n = x.size
    itemsize = jnp.dtype(orig_dtype).itemsize
    sub_min = _SUBLANE_MIN.get(itemsize, 8)

    # Fallback path: tiny tensors or sizes that would force a pad-copy.
    if n == 0 or (n % 128) != 0 or (n * itemsize) < min_kernel_bytes:
        return jnp.clip(x, 0.0, 1.0)

    # Pick the widest lane count that divides the flat length exactly, so the
    # 2D slab is built with a free (contiguous) reshape -- no padding copy.
    lanes = 128
    for c in _LANE_CANDIDATES:
        if n % c == 0:
            lanes = c
            break
    rows = n // lanes
    x2d = jnp.reshape(x, (rows, lanes))

    # Block rows: aim for ~block_bytes per block, rounded to the dtype's
    # minimum sublane multiple (or the full extent if the slab is small).
    target_rows = max(1, block_bytes // (lanes * itemsize))
    if target_rows >= rows:
        block_rows = rows                      # full-extent block: always legal
    else:
        block_rows = max(sub_min, (target_rows // sub_min) * sub_min)
        block_rows = min(block_rows, rows)

    grid = (pl.cdiv(rows, block_rows),)        # ragged last block is masked

    out2d = pl.pallas_call(
        _brelu_kernel,
        out_shape=jax.ShapeDtypeStruct((rows, lanes), orig_dtype),
        grid_spec=pltpu.PrefetchScalarGridSpec(
            num_scalar_prefetch=0,
            grid=grid,
            in_specs=[pl.BlockSpec((block_rows, lanes), lambda i: (i, 0))],
            out_specs=pl.BlockSpec((block_rows, lanes), lambda i: (i, 0)),
        ),
        compiler_params=pltpu.CompilerParams(
            dimension_semantics=("parallel",)),   # shards across v7x's 2 TCs
    )(x2d)

    return jnp.reshape(out2d, orig_shape)


if __name__ == "__main__":
    key = jax.random.PRNGKey(0)
    k1, k2, k3 = jax.random.split(key, 3)

    checks = []

    # 1) Small NCHW activation (2,4,16,16), forced through the kernel path
    #    (lane-dense single block).
    x_small = jax.random.normal(k1, (2, 4, 16, 16), dtype=jnp.float32) * 2.0
    y_small = jax.block_until_ready(brelu(x_small, min_kernel_bytes=0))
    checks.append((x_small, y_small))

    # 2) Same small activation through the default path -> jnp.clip fallback.
    y_small_fb = jax.block_until_ready(brelu(x_small))
    checks.append((x_small, y_small_fb))

    # 3) Larger activation: default kernel path, wide (4096-lane) slab.
    x_big = jax.random.normal(k2, (2, 32, 64, 64), dtype=jnp.float32) * 2.0
    y_big = jax.block_until_ready(brelu(x_big))
    checks.append((x_big, y_big))

    # 4) Row count not divisible by the block: exercises the ragged last block
    #    (grid = cdiv(15, 8) = 2, partial second block).
    x_rag = jax.random.normal(k3, (2, 3, 40, 128), dtype=jnp.float32) * 2.0
    y_rag = jax.block_until_ready(
        brelu(x_rag, min_kernel_bytes=0, block_bytes=8 * 2048 * 4))
    checks.append((x_rag, y_rag))

    for x, y in checks:
        y_ref = jnp.clip(x, 0.0, 1.0)          # == relu6(6x)/6
        assert y.shape == x.shape and y.dtype == x.dtype
        assert jnp.max(jnp.abs(y - y_ref)) < 1e-6

    print("KERNEL_OK")
</pallas_src>

<mosaic_0001>
module attributes {stable_mosaic.version = 11 : i64} {
  func.func @_brelu_kernel(%arg0: i32, %arg1: memref<1x2048xf32, #tpu.memory_space<vmem>>, %arg2: memref<1x2048xf32, #tpu.memory_space<vmem>>) attributes {dimension_semantics = [#tpu.dimension_semantics<parallel>], iteration_bounds = array<i64: 1>, scalar_prefetch = 0 : i64, scratch_operands = 0 : i64, tpu.core_type = #tpu.core_type<tc>, window_params = [{transform_indices = @transform_0, window_bounds = array<i64: 1, 2048>}, {transform_indices = @transform_1, window_bounds = array<i64: 1, 2048>}]} {
    %c0 = arith.constant 0 : index
    %c0_0 = arith.constant 0 : index
    %0 = vector.load %arg1[%c0, %c0_0] : memref<1x2048xf32, #tpu.memory_space<vmem>>, vector<1x2048xf32>
    %cst = arith.constant 0.000000e+00 : f32
    %1 = vector.broadcast %cst : f32 to vector<1x2048xf32>
    %2 = arith.maximumf %0, %1 : vector<1x2048xf32>
    %cst_1 = arith.constant 1.000000e+00 : f32
    %3 = vector.broadcast %cst_1 : f32 to vector<1x2048xf32>
    %4 = arith.minimumf %2, %3 : vector<1x2048xf32>
    %c0_2 = arith.constant 0 : index
    %c0_3 = arith.constant 0 : index
    %5 = vector.load %arg2[%c0_2, %c0_3] : memref<1x2048xf32, #tpu.memory_space<vmem>>, vector<1x2048xf32>
    tpu.vector_store %arg2[%c0_2, %c0_3], %4 {strides = array<i32>} : memref<1x2048xf32, #tpu.memory_space<vmem>>, vector<1x2048xf32>,
    return
  }
  func.func @transform_0(%arg0: i32) -> (i32, i32) {
    %c0_i32 = arith.constant 0 : i32
    %c0_i32_0 = arith.constant 0 : i32
    return %arg0, %c0_i32 : i32, i32
  }
  func.func @transform_1(%arg0: i32) -> (i32, i32) {
    %c0_i32 = arith.constant 0 : i32
    %c0_i32_0 = arith.constant 0 : i32
    return %arg0, %c0_i32 : i32, i32
  }
}

</mosaic_0001>

<llo_original>
// kernel: tpu_custom_call.1
$region0: #{tpu_custom_call.1}
  #allocation0 [shape = 'u32[]', space=smem, size = 0x4, offset = 0x4, fixed_abs, tag = 'smem constant byte address 0x4 - core index']
  #allocation1 [shape = 'u32[144,128]{1,0:T(1,128)}', space=vmem, size = 0x12000, scoped, tag = 'internal scratch']
  %s0 = inlined_call_operand.hbm [shape: f32[1,2048], index: 0, kind: input, shape index: {}]
  %s1 = inlined_call_operand.hbm [shape: f32[1,2048], index: 1, kind: output, shape index: {}]
  %s2 = sld [smem:[#allocation0]]
  $region18: #{tpu_custom_call.1} parent=0
    _
  %s4 = ssub.s32 1, %s2
  %s5 = scalar_select 0, %s4, %s2
  $region1: #{tpu_custom_call.1} parent=0
    #allocation2 [shape = 'u8[8192]{0}', space=vmem, size = 0x2000, scoped, tag = 'input window, operand 0, single buffered']
    #allocation3 [shape = 's32[1]{0}', space=sflag, size = 0x4, scoped, tag = 'scoped memory for tpu_custom_call.1']
    #allocation4 [shape = 's32[1]{0}', space=sflag, size = 0x4, scoped, tag = 'scoped memory for tpu_custom_call.1']
    #allocation5 [shape = 'u8[8192]{0}', space=vmem, size = 0x2000, scoped, tag = 'output window, operand 0, single buffered']
    %6 = vsyncpa [#allocation3], 0
    %7 = vsyncpa [#allocation4], 0
    // Predicated region
    $region2: #{tpu_custom_call.1} parent=1 // pred_check
      _
    $region3: #{tpu_custom_call.1} parent=1 // pred_check_branch
      %9 = sbr.rel (0) target = $region5
    $region4: #{tpu_custom_call.1} parent=1 // pred_region
      %s11 = ssub.s32 256, 256
      %12 = vsyncadd [#allocation3], %s11
      %s14 = sshll.u32 [#allocation2], 4
      %s15 = int_to_ptr.vmem [resolvable:$true] %s14
      %17 = dma.hbm_to_vmem [thread:$0]  %s0, 256, %s15, [#allocation3]
    $region5: #{tpu_custom_call.1} parent=1 // pred_fallthru
      _
    // Predicated region
    $region6: #{tpu_custom_call.1} parent=1 // pred_check
      _
    $region7: #{tpu_custom_call.1} parent=1 // pred_check_branch
      %19 = sbr.rel (0) target = $region9
    $region8: #{tpu_custom_call.1} parent=1 // pred_region
      %20 = dma.done [#allocation3], 256
    $region9: #{tpu_custom_call.1} parent=1 // pred_fallthru
      _
    %v21 = vld [vmem:[#allocation2] sm:$0xff]
    %v22 = vld [vmem:[#allocation2 + $0x8] sm:$0xff]
    %v23 = vmax.f32 %v21, 0.0
    %v24 = vmax.f32 %v22, 0.0
    %v25 = vmin.f32 %v23, 1.0
    %v26 = vmin.f32 %v24, 1.0
    %27 = vst [vmem:[#allocation5] sm:$0xff] %v25
    %28 = vst [vmem:[#allocation5 + $0x8] sm:$0xff] %v26
    // Predicated region
    $region10: #{tpu_custom_call.1} parent=1 // pred_check
      _
    $region11: #{tpu_custom_call.1} parent=1 // pred_check_branch
      %30 = sbr.rel (0) target = $region13
    $region12: #{tpu_custom_call.1} parent=1 // pred_region
      %s32 = ssub.s32 256, 256
      %33 = vsyncadd [#allocation4], %s32
      %s35 = sshll.u32 [#allocation5], 4
      %s36 = int_to_ptr.vmem [resolvable:$true] %s35
      %38 = dma.vmem_to_hbm [thread:$0]  %s36, 256, %s1, [#allocation4]
    $region13: #{tpu_custom_call.1} parent=1 // pred_fallthru
      _
    // Predicated region
    $region14: #{tpu_custom_call.1} parent=1 // pred_check
      _
    $region15: #{tpu_custom_call.1} parent=1 // pred_check_branch
      %40 = sbr.rel (0) target = $region17
    $region16: #{tpu_custom_call.1} parent=1 // pred_region
      %41 = dma.done [#allocation4], 256
    $region17: #{tpu_custom_call.1} parent=1 // pred_fallthru
      _
    %42 = vsyncpa [#allocation3], 1
    %43 = vsyncpa [#allocation4], 1

</llo_original>
